<compile_context>
chip_gen: v6e
topology: v6e:2x2x1
jax: 0.10.0
libtpu: 0.0.40
codegen_flags: <defaults>
</compile_context>

<pallas_src>
import jax
import jax.numpy as jnp
from jax.experimental import pallas as pl
from jax.experimental.pallas import tpu as pltpu


def _round_up(n: int, m: int) -> int:
    return ((n + m - 1) // m) * m


def _make_kernel(training: bool, split: bool, D: int):
    def kernel(*refs):
        if split:
            mean = refs[0][...].astype(jnp.float32)      # (TB, D) lane-aligned tile
            logvar = refs[1][...].astype(jnp.float32)    # (TB, D) lane-aligned tile
            rest = refs[2:]
        else:
            x_ref = refs[0]                              # (TB, 2D) tile (unaligned-D fallback)
            x_f32 = x_ref[...].astype(jnp.float32)
            mean = x_f32[:, :D]
            logvar = x_f32[:, D:]
            rest = refs[1:]

        if training:
            eps_ref, sample_ref, divp_ref = rest
            std = jnp.exp(0.5 * logvar)                  # single EUP exp per element
            sample = mean + std * eps_ref[...].astype(jnp.float32)
            sample_ref[...] = sample.astype(sample_ref.dtype)
            var = std * std                              # exp(logvar) via a free VPU mul
        else:
            sample_ref, divp_ref = rest
            sample_ref[...] = mean.astype(sample_ref.dtype)
            var = jnp.exp(logvar)

        kl_elem = 0.5 * (var + mean * mean - logvar - 1.0)   # f32
        # Sublane-only partial reduce; the cross-lane reduce + divide-by-B happens once in JAX.
        divp_ref[...] = jnp.sum(kl_elem, axis=0, keepdims=True).reshape(1, 1, D)

    return kernel


def reparameteriser(x: jax.Array, eps: jax.Array | None = None, *,
                    training: bool = True, block_b: int | None = None):
    """Pallas implementation of Reparameteriser.forward (divergence='kl').

    Args:
      x:   (B, 2*D) (mean | logvar along axis 1)
      eps: (B, D) standard-normal noise; required (and DMA'd) only when training=True
    Returns:
      (sample: (B, D), div: scalar float32)
    """
    B, C = x.shape
    assert C % 2 == 0, "feature dim must be even (mean | logvar)"
    D = C // 2
    if training:
        assert eps is not None and eps.shape == (B, D), "eps of shape (B, D) required when training"

    # ---- tile-size selection --------------------------------------------------
    # double-buffered per-step working set ~= 2 * TB * row_bytes; keep it <= ~8 MiB
    # so it fits even v5e's 16 MiB default scoped VMEM without raising limits.
    itemsize = jnp.dtype(x.dtype).itemsize
    row_bytes = itemsize * D * (4 if training else 3)        # mean+logvar+sample (+eps)
    if block_b is None:
        block_b = (8 * 1024 * 1024) // max(2 * row_bytes, 1)
    block_b = max(8, min(1024, (block_b // 8) * 8))
    TB = min(block_b, _round_up(B, 8))

    # ---- pad batch so TB divides it (zero rows contribute exactly 0 to the KL) ----
    B_pad = _round_up(B, TB)
    if B_pad != B:
        x = jnp.pad(x, ((0, B_pad - B), (0, 0)))
        if training:
            eps = jnp.pad(eps, ((0, B_pad - B), (0, 0)))
    num_tiles = B_pad // TB

    # ---- BlockSpecs -----------------------------------------------------------
    split = (D % 128 == 0)
    if split:
        # mean / logvar as two lane-aligned tiles over the SAME array (no in-kernel slicing).
        in_specs = [
            pl.BlockSpec((TB, D), lambda i: (i, 0)),         # mean   = x[:, :D]
            pl.BlockSpec((TB, D), lambda i: (i, 1)),         # logvar = x[:, D:]
        ]
        inputs = [x, x]
    else:
        in_specs = [pl.BlockSpec((TB, 2 * D), lambda i: (i, 0))]
        inputs = [x]
    if training:
        in_specs.append(pl.BlockSpec((TB, D), lambda i: (i, 0)))
        inputs.append(eps)

    out_shape = (
        jax.ShapeDtypeStruct((B_pad, D), x.dtype),             # sample
        jax.ShapeDtypeStruct((num_tiles, 1, D), jnp.float32),  # per-tile KL partial sums
    )
    out_specs = [
        pl.BlockSpec((TB, D), lambda i: (i, 0)),
        pl.BlockSpec((1, 1, D), lambda i: (i, 0, 0)),
    ]

    sample, div_partial = pl.pallas_call(
        _make_kernel(training, split, D),
        out_shape=out_shape,
        grid_spec=pltpu.PrefetchScalarGridSpec(
            num_scalar_prefetch=0,
            grid=(num_tiles,),
            in_specs=in_specs,
            out_specs=out_specs,
        ),
        compiler_params=pltpu.CompilerParams(
            dimension_semantics=("parallel",)),                # no carried state -> megacore friendly
    )(*inputs)

    if B_pad != B:
        sample = sample[:B]
    # single cross-lane reduce + single divide by the true batch size
    div = jnp.sum(div_partial, dtype=jnp.float32) / jnp.float32(B)
    return sample, div


def _reference(x, eps=None, training=True):
    D = x.shape[1] // 2
    mean, logvar = x[:, :D], x[:, D:]
    sample = mean + jnp.exp(0.5 * logvar) * eps if training else mean
    kl_elem = 0.5 * (-1.0 - logvar + jnp.exp(logvar) + mean ** 2)
    return sample, jnp.sum(jnp.mean(kl_elem, axis=0))


if __name__ == "__main__":
    key = jax.random.PRNGKey(0)

    # 1) lane-aligned path (D % 128 == 0): split mean/logvar BlockSpecs, training mode
    kx, keps, key = jax.random.split(key, 3)
    B, D = 16, 128
    x = jax.random.normal(kx, (B, 2 * D), dtype=jnp.float32)
    eps = jax.random.normal(keps, (B, D), dtype=jnp.float32)
    s, d = reparameteriser(x, eps, training=True)
    jax.block_until_ready((s, d))
    rs, rd = _reference(x, eps, training=True)
    assert s.shape == (B, D)
    assert jnp.allclose(s, rs, atol=1e-5, rtol=1e-5)
    assert jnp.allclose(d, rd, atol=1e-5, rtol=1e-5)

    # 2) eval mode: eps not passed at all, sample == mean
    s_e, d_e = reparameteriser(x, training=False)
    jax.block_until_ready((s_e, d_e))
    _, rd_e = _reference(x, training=False)
    assert jnp.allclose(s_e, x[:, :D], atol=1e-6)
    assert jnp.allclose(d_e, rd_e, atol=1e-5, rtol=1e-5)

    # 3) multi-tile + batch-padding path (B=20 not a multiple of TB=8)
    kx, keps, key = jax.random.split(key, 3)
    B3, D3 = 20, 128
    x3 = jax.random.normal(kx, (B3, 2 * D3), dtype=jnp.float32)
    eps3 = jax.random.normal(keps, (B3, D3), dtype=jnp.float32)
    s3, d3 = reparameteriser(x3, eps3, training=True, block_b=8)
    jax.block_until_ready((s3, d3))
    rs3, rd3 = _reference(x3, eps3, training=True)
    assert jnp.allclose(s3, rs3, atol=1e-5, rtol=1e-5)
    assert jnp.allclose(d3, rd3, atol=1e-5, rtol=1e-5)

    # 4) unaligned-D fallback path (D = 32, the original small test shape)
    kx, keps, key = jax.random.split(key, 3)
    B4, D4 = 8, 32
    x4 = jax.random.normal(kx, (B4, 2 * D4), dtype=jnp.float32)
    eps4 = jax.random.normal(keps, (B4, D4), dtype=jnp.float32)
    s4, d4 = reparameteriser(x4, eps4, training=True)
    jax.block_until_ready((s4, d4))
    rs4, rd4 = _reference(x4, eps4, training=True)
    assert jnp.allclose(s4, rs4, atol=1e-5, rtol=1e-5)
    assert jnp.allclose(d4, rd4, atol=1e-5, rtol=1e-5)

    # 5) bf16 input path (KL math in f32, sample stored as bf16)
    kx, keps, key = jax.random.split(key, 3)
    B5, D5 = 16, 128
    x5 = jax.random.normal(kx, (B5, 2 * D5), dtype=jnp.float32).astype(jnp.bfloat16)
    eps5 = jax.random.normal(keps, (B5, D5), dtype=jnp.float32).astype(jnp.bfloat16)
    s5, d5 = reparameteriser(x5, eps5, training=True)
    jax.block_until_ready((s5, d5))
    rs5, rd5 = _reference(x5.astype(jnp.float32), eps5.astype(jnp.float32), training=True)
    assert s5.dtype == jnp.bfloat16
    assert jnp.allclose(s5.astype(jnp.float32), rs5, atol=2e-2, rtol=2e-2)
    assert jnp.allclose(d5, rd5, atol=2e-2, rtol=2e-2)

    print("KERNEL_OK")
</pallas_src>

<mosaic_0001>
module attributes {stable_mosaic.version = 11 : i64} {
  func.func @kernel(%arg0: i32, %arg1: memref<16x128xf32, #tpu.memory_space<vmem>>, %arg2: memref<16x128xf32, #tpu.memory_space<vmem>>, %arg3: memref<16x128xf32, #tpu.memory_space<vmem>>, %arg4: memref<16x128xf32, #tpu.memory_space<vmem>>, %arg5: memref<1x1x128xf32, #tpu.memory_space<vmem>>) attributes {dimension_semantics = [#tpu.dimension_semantics<parallel>], iteration_bounds = array<i64: 1>, scalar_prefetch = 0 : i64, scratch_operands = 0 : i64, tpu.core_type = #tpu.core_type<tc>, window_params = [{transform_indices = @transform_0, window_bounds = array<i64: 16, 128>}, {transform_indices = @transform_1, window_bounds = array<i64: 16, 128>}, {transform_indices = @transform_2, window_bounds = array<i64: 16, 128>}, {transform_indices = @transform_3, window_bounds = array<i64: 16, 128>}, {transform_indices = @transform_4, window_bounds = array<i64: 1, 1, 128>}]} {
    %c0 = arith.constant 0 : index
    %c0_0 = arith.constant 0 : index
    %0 = vector.load %arg1[%c0, %c0_0] : memref<16x128xf32, #tpu.memory_space<vmem>>, vector<16x128xf32>
    %c0_1 = arith.constant 0 : index
    %c0_2 = arith.constant 0 : index
    %1 = vector.load %arg2[%c0_1, %c0_2] : memref<16x128xf32, #tpu.memory_space<vmem>>, vector<16x128xf32>
    %cst = arith.constant 5.000000e-01 : f32
    %2 = vector.broadcast %cst : f32 to vector<16x128xf32>
    %3 = arith.mulf %2, %1 : vector<16x128xf32>
    %4 = math.exp %3 : vector<16x128xf32>
    %c0_3 = arith.constant 0 : index
    %c0_4 = arith.constant 0 : index
    %5 = vector.load %arg3[%c0_3, %c0_4] : memref<16x128xf32, #tpu.memory_space<vmem>>, vector<16x128xf32>
    %6 = arith.mulf %4, %5 : vector<16x128xf32>
    %7 = arith.addf %0, %6 : vector<16x128xf32>
    %c0_5 = arith.constant 0 : index
    %c0_6 = arith.constant 0 : index
    %8 = vector.load %arg4[%c0_5, %c0_6] : memref<16x128xf32, #tpu.memory_space<vmem>>, vector<16x128xf32>
    tpu.vector_store %arg4[%c0_5, %c0_6], %7 {strides = array<i32>} : memref<16x128xf32, #tpu.memory_space<vmem>>, vector<16x128xf32>,
    %9 = arith.mulf %4, %4 : vector<16x128xf32>
    %10 = arith.mulf %0, %0 : vector<16x128xf32>
    %11 = arith.addf %9, %10 : vector<16x128xf32>
    %12 = arith.subf %11, %1 : vector<16x128xf32>
    %cst_7 = arith.constant 1.000000e+00 : f32
    %13 = vector.broadcast %cst_7 : f32 to vector<16x128xf32>
    %14 = arith.subf %12, %13 : vector<16x128xf32>
    %cst_8 = arith.constant 5.000000e-01 : f32
    %15 = vector.broadcast %cst_8 : f32 to vector<16x128xf32>
    %16 = arith.mulf %15, %14 : vector<16x128xf32>
    %cst_9 = arith.constant dense<0.000000e+00> : vector<128xf32>
    %17 = vector.multi_reduction <add>, %16, %cst_9 [0] : vector<16x128xf32> to vector<128xf32>
    %18 = vector.shape_cast %17 : vector<128xf32> to vector<1x128xf32>
    %19 = vector.shape_cast %18 : vector<1x128xf32> to vector<1x1x128xf32>
    %c0_10 = arith.constant 0 : index
    %c0_11 = arith.constant 0 : index
    %c0_12 = arith.constant 0 : index
    %20 = vector.load %arg5[%c0_10, %c0_11, %c0_12] : memref<1x1x128xf32, #tpu.memory_space<vmem>>, vector<1x1x128xf32>
    tpu.vector_store %arg5[%c0_10, %c0_11, %c0_12], %19 {strides = array<i32>} : memref<1x1x128xf32, #tpu.memory_space<vmem>>, vector<1x1x128xf32>,
    return
  }
  func.func @transform_0(%arg0: i32) -> (i32, i32) {
    %c0_i32 = arith.constant 0 : i32
    %c0_i32_0 = arith.constant 0 : i32
    return %arg0, %c0_i32 : i32, i32
  }
  func.func @transform_1(%arg0: i32) -> (i32, i32) {
    %c1_i32 = arith.constant 1 : i32
    %c0_i32 = arith.constant 0 : i32
    return %arg0, %c1_i32 : i32, i32
  }
  func.func @transform_2(%arg0: i32) -> (i32, i32) {
    %c0_i32 = arith.constant 0 : i32
    %c0_i32_0 = arith.constant 0 : i32
    return %arg0, %c0_i32 : i32, i32
  }
  func.func @transform_3(%arg0: i32) -> (i32, i32) {
    %c0_i32 = arith.constant 0 : i32
    %c0_i32_0 = arith.constant 0 : i32
    return %arg0, %c0_i32 : i32, i32
  }
  func.func @transform_4(%arg0: i32) -> (i32, i32, i32) {
    %c0_i32 = arith.constant 0 : i32
    %c0_i32_0 = arith.constant 0 : i32
    %c0_i32_1 = arith.constant 0 : i32
    return %arg0, %c0_i32, %c0_i32_0 : i32, i32, i32
  }
}

</mosaic_0001>

<llo_original>
// kernel: tpu_custom_call.1
$region0: #{tpu_custom_call.1}
  #allocation0 [shape = 'u32[]', space=smem, size = 0x4, offset = 0x4, fixed_abs, tag = 'smem constant byte address 0x4 - core index']
  #allocation1 [shape = 'u32[144,128]{1,0:T(1,128)}', space=vmem, size = 0x12000, scoped, tag = 'internal scratch']
  %s0 = inlined_call_operand.hbm [shape: f32[16,256], index: 0, kind: input, shape index: {}]
  %s1 = inlined_call_operand.hbm [shape: f32[16,256], index: 1, kind: input, shape index: {}]
  %s2 = inlined_call_operand.hbm [shape: f32[16,128], index: 2, kind: input, shape index: {}]
  %s3 = inlined_call_operand.hbm [shape: f32[16,128], index: 3, kind: output, shape index: {0}]
  %s4 = inlined_call_operand.hbm [shape: f32[1,1,128], index: 4, kind: output, shape index: {1}]
  %5 = xla_tuple %s3, %s4
  %s6 = sld [smem:[#allocation0]]
  $region42: #{tpu_custom_call.1} parent=0
    _
  %s8 = ssub.s32 1, %s6
  %s9 = scalar_select 0, %s8, %s6
  $region1: #{tpu_custom_call.1} parent=0
    #allocation2 [shape = 'u8[8192]{0}', space=vmem, size = 0x2000, scoped, tag = 'input window, operand 0, single buffered']
    #allocation3 [shape = 's32[1]{0}', space=sflag, size = 0x4, scoped, tag = 'scoped memory for tpu_custom_call.1']
    #allocation4 [shape = 's32[1]{0}', space=sflag, size = 0x4, scoped, tag = 'scoped memory for tpu_custom_call.1']
    #allocation5 [shape = 'u8[8192]{0}', space=vmem, size = 0x2000, scoped, tag = 'input window, operand 1, single buffered']
    #allocation6 [shape = 's32[1]{0}', space=sflag, size = 0x4, scoped, tag = 'scoped memory for tpu_custom_call.1']
    #allocation7 [shape = 'u8[8192]{0}', space=vmem, size = 0x2000, scoped, tag = 'input window, operand 2, single buffered']
    #allocation8 [shape = 'u8[8192]{0}', space=vmem, size = 0x2000, scoped, tag = 'output window, operand 0, single buffered']
    #allocation9 [shape = 'u8[512]{0}', space=vmem, size = 0x400, scoped, tag = 'output window, operand 1, single buffered']
    #allocation10 [shape = 's32[1]{0}', space=sflag, size = 0x4, scoped, tag = 'scoped memory for tpu_custom_call.1']
    %10 = vsyncpa [#allocation3], 0
    %11 = vsyncpa [#allocation6], 0
    %12 = vsyncpa [#allocation4], 0
    %13 = vsyncpa [#allocation10], 0
    // Predicated region
    $region2: #{tpu_custom_call.1} parent=1 // pred_check
      _
    $region3: #{tpu_custom_call.1} parent=1 // pred_check_branch
      %15 = sbr.rel (0) target = $region5
    $region4: #{tpu_custom_call.1} parent=1 // pred_region
      %s17 = ssub.s32 256, 256
      %18 = vsyncadd [#allocation3], %s17
      %s19 = sshll.u32 [#allocation2], 4
      %s20 = int_to_ptr.vmem [resolvable:$true] %s19
      %25 = dma.hbm_to_vmem [thread:$0]  %s0, 256, %s20, [#allocation3], 256, 128, 8
    $region5: #{tpu_custom_call.1} parent=1 // pred_fallthru
      _
    // Predicated region
    $region6: #{tpu_custom_call.1} parent=1 // pred_check
      _
    $region7: #{tpu_custom_call.1} parent=1 // pred_check_branch
      %27 = sbr.rel (0) target = $region9
    $region8: #{tpu_custom_call.1} parent=1 // pred_region
      %s29 = ssub.s32 256, 256
      %30 = vsyncadd [#allocation6], %s29
      %s31 = scalar_lea.hbm %s1, 128
      %s32 = sshll.u32 [#allocation5], 4
      %s33 = int_to_ptr.vmem [resolvable:$true] %s32
      %38 = dma.hbm_to_vmem [thread:$0]  %s31, 256, %s33, [#allocation6], 256, 128, 8
    $region9: #{tpu_custom_call.1} parent=1 // pred_fallthru
      _
    // Predicated region
    $region10: #{tpu_custom_call.1} parent=1 // pred_check
      _
    $region11: #{tpu_custom_call.1} parent=1 // pred_check_branch
      %40 = sbr.rel (0) target = $region13
    $region12: #{tpu_custom_call.1} parent=1 // pred_region
      %s42 = ssub.s32 256, 256
      %43 = vsyncadd [#allocation6], %s42
      %s44 = sshll.u32 [#allocation7], 4
      %s45 = int_to_ptr.vmem [resolvable:$true] %s44
      %50 = dma.hbm_to_vmem [thread:$0]  %s2, 256, %s45, [#allocation6], 128, 128, 8
    $region13: #{tpu_custom_call.1} parent=1 // pred_fallthru
      _
    // Predicated region
    $region14: #{tpu_custom_call.1} parent=1 // pred_check
      _
    $region15: #{tpu_custom_call.1} parent=1 // pred_check_branch
      %52 = sbr.rel (0) target = $region17
    $region16: #{tpu_custom_call.1} parent=1 // pred_region
      %53 = dma.done [#allocation3], 256
    $region17: #{tpu_custom_call.1} parent=1 // pred_fallthru
      _
    // Predicated region
    $region18: #{tpu_custom_call.1} parent=1 // pred_check
      _
    $region19: #{tpu_custom_call.1} parent=1 // pred_check_branch
      %55 = sbr.rel (0) target = $region21
    $region20: #{tpu_custom_call.1} parent=1 // pred_region
      %56 = dma.done [#allocation6], 256
    $region21: #{tpu_custom_call.1} parent=1 // pred_fallthru
      _
    // Predicated region
    $region22: #{tpu_custom_call.1} parent=1 // pred_check
      _
    $region23: #{tpu_custom_call.1} parent=1 // pred_check_branch
      %58 = sbr.rel (0) target = $region25
    $region24: #{tpu_custom_call.1} parent=1 // pred_region
      %59 = dma.done [#allocation6], 256
    $region25: #{tpu_custom_call.1} parent=1 // pred_fallthru
      _
    %v60 = vld [vmem:[#allocation2] sm:$0xff]
    %v61 = vld [vmem:[#allocation2 + $0x8] sm:$0xff]
    %v62 = vld [vmem:[#allocation5] sm:$0xff]
    %v63 = vld [vmem:[#allocation5 + $0x8] sm:$0xff]
    %v64 = vmul.f32 %v62, 0.5
    %v65 = vmul.f32 %v63, 0.5
    %v66 = vmul.f32 %v64, 1.442695
    %v67 = vpow.pop %v66
    %v68 = vmul.f32 %v65, 1.442695
    %v69 = vpow.pop %v68
    %v70 = vld [vmem:[#allocation7] sm:$0xff]
    %v71 = vld [vmem:[#allocation7 + $0x8] sm:$0xff]
    %v72 = vmul.f32 %v67, %v70
    %v73 = vmul.f32 %v69, %v71
    %v74 = vadd.f32 %v60, %v72
    %v75 = vadd.f32 %v61, %v73
    %76 = vst [vmem:[#allocation8] sm:$0xff] %v74
    %77 = vst [vmem:[#allocation8 + $0x8] sm:$0xff] %v75
    %v78 = vmul.f32 %v67, %v67
    %v79 = vmul.f32 %v69, %v69
    %v80 = vmul.f32 %v60, %v60
    %v81 = vmul.f32 %v61, %v61
    %v82 = vadd.f32 %v78, %v80
    %v83 = vadd.f32 %v79, %v81
    %v84 = vsub.f32 %v82, %v62
    %v85 = vsub.f32 %v83, %v63
    %v86 = vsub.f32 %v84, 1.0
    %v87 = vsub.f32 %v85, 1.0
    %v88 = vmul.f32 %v86, 0.5
    %v89 = vmul.f32 %v87, 0.5
    %v90 = vadd.f32 %v88, %v89
    %v91 = vrot.slane %v90, 4
    %v92 = vadd.f32 %v90, %v91
    %v93 = vrot.slane %v92, 2
    %v94 = vadd.f32 %v92, %v93
    %v95 = vrot.slane %v94, 1
    %v96 = vadd.f32 %v94, %v95
    %97 = vst [vmem:[#allocation9] sm:$0x1] %v96
    // Predicated region
    $region26: #{tpu_custom_call.1} parent=1 // pred_check
      _
    $region27: #{tpu_custom_call.1} parent=1 // pred_check_branch
      %99 = sbr.rel (0) target = $region29
    $region28: #{tpu_custom_call.1} parent=1 // pred_region
      %s101 = ssub.s32 256, 256
      %102 = vsyncadd [#allocation4], %s101
      %s103 = sshll.u32 [#allocation8], 4
      %s104 = int_to_ptr.vmem [resolvable:$true] %s103
      %109 = dma.vmem_to_hbm [thread:$0]  %s104, 256, %s3, [#allocation4], 128, 128, 8
    $region29: #{tpu_custom_call.1} parent=1 // pred_fallthru
      _
    // Predicated region
    $region30: #{tpu_custom_call.1} parent=1 // pred_check
      _
    $region31: #{tpu_custom_call.1} parent=1 // pred_check_branch
      %111 = sbr.rel (0) target = $region33
    $region32: #{tpu_custom_call.1} parent=1 // pred_region
      %s113 = ssub.s32 16, 16
      %114 = vsyncadd [#allocation10], %s113
      %s116 = sshll.u32 [#allocation9], 4
      %s117 = int_to_ptr.vmem [resolvable:$true] %s116
      %119 = dma.vmem_to_hbm [thread:$0]  %s117, 16, %s4, [#allocation10]
    $region33: #{tpu_custom_call.1} parent=1 // pred_fallthru
      _
    // Predicated region
    $region34: #{tpu_custom_call.1} parent=1 // pred_check
      _
    $region35: #{tpu_custom_call.1} parent=1 // pred_check_branch
      %121 = sbr.rel (0) target = $region37
    $region36: #{tpu_custom_call.1} parent=1 // pred_region
      %122 = dma.done [#allocation4], 256
    $region37: #{tpu_custom_call.1} parent=1 // pred_fallthru
      _
    // Predicated region
    $region38: #{tpu_custom_call.1} parent=1 // pred_check
      _
    $region39: #{tpu_custom_call.1} parent=1 // pred_check_branch
      %124 = sbr.rel (0) target = $region41
    $region40: #{tpu_custom_call.1} parent=1 // pred_region
      %125 = dma.done [#allocation10], 16
    $region41: #{tpu_custom_call.1} parent=1 // pred_fallthru
      _
    %126 = vsyncpa [#allocation3], 1
    %127 = vsyncpa [#allocation6], 1
    %128 = vsyncpa [#allocation4], 1
    %129 = vsyncpa [#allocation10], 1

</llo_original>
